<compile_context>
chip_gen: v6e
topology: v6e:2x2x1
jax: 0.10.0
libtpu: 0.0.40
codegen_flags: <defaults>
</compile_context>

<pallas_src>
import jax
import jax.numpy as jnp
from jax.experimental import pallas as pl
from jax.experimental.pallas import tpu as pltpu

EPS = 1e-5


def _bn_inference_kernel(scale_ref, shift_ref, x_ref, o_ref):
    # scale_ref / shift_ref: (TR, 1) f32 per-row affine.
    # x_ref / o_ref:         (TR, TL) tiles of the flattened (N*C, L) input/output.
    x = x_ref[...].astype(jnp.float32)
    y = x * scale_ref[...] + shift_ref[...]          # (TR,1) broadcast over lanes
    o_ref[...] = y.astype(o_ref.dtype)


def _round_down(v, m):
    return (v // m) * m


def _vmem_budget():
    """Return (block_budget_bytes, vmem_limit_bytes), generation-aware."""
    cap = None
    try:
        cap = int(pltpu.get_tpu_info().vmem_capacity_bytes)
    except Exception:
        cap = None
    if cap is None:
        return 4 * 1024 * 1024, 32 * 1024 * 1024          # conservative, safe everywhere
    if cap >= 96 * 1024 * 1024:                           # v5e / v6e: 128 MiB VMEM
        return 8 * 1024 * 1024, 64 * 1024 * 1024
    return 4 * 1024 * 1024, 40 * 1024 * 1024              # v7x-like: 64 MiB VMEM


def _pick_tiles(rows, L, itemsize, budget):
    """Pick (TR, TL) tiles.

    Prefer TL = L (contiguous HBM transfer per block), then grow TR; only when a
    full-L row band of `sublane` rows overflows the budget do we shrink TL to a
    lane-aligned chunk.  Every returned dim is either a multiple of (8|16, 128)
    or equal to the full extent, so the BlockSpec is always legal; the grid uses
    cdiv so ragged edges are handled by Pallas.
    """
    sublane = 16 if itemsize == 2 else 8
    row_bytes = L * itemsize
    if row_bytes * sublane <= budget:
        TL = L
        TR = min(rows, max(sublane, _round_down(budget // row_bytes, sublane)))
    else:
        TR = min(rows, sublane)
        TL = min(L, max(128, _round_down(budget // (TR * itemsize), 128)))
    return TR, TL


def native_batch_norm_1d(x, weight, bias, running_mean, running_var, eps=EPS):
    """Inference-mode batch norm over (N, C, L) input.

    Returns the normalized output (the primary result of aten.native_batch_norm
    in eval mode).
    """
    # TODO(synk): aten.native_batch_norm also returns save_mean / save_invstd
    # (empty tensors in eval mode); only the normalized output is produced here.
    N, C, L = x.shape
    f32 = jnp.float32

    if weight is None:
        weight = jnp.ones((C,), f32)
    if bias is None:
        bias = jnp.zeros((C,), f32)

    # Fold running stats + affine params into per-channel scale/shift (f32, tiny),
    # then expand per-row for the flattened (N*C, L) layout.
    inv_std = jax.lax.rsqrt(running_var.astype(f32) + eps)
    scale = weight.astype(f32) * inv_std                     # (C,)
    shift = bias.astype(f32) - running_mean.astype(f32) * scale
    rows = N * C
    scale_rows = jnp.broadcast_to(scale[None, :], (N, C)).reshape(rows, 1)
    shift_rows = jnp.broadcast_to(shift[None, :], (N, C)).reshape(rows, 1)

    x2d = x.reshape(rows, L)

    itemsize = jnp.dtype(x.dtype).itemsize
    block_budget, vmem_limit = _vmem_budget()
    TR, TL = _pick_tiles(rows, L, itemsize, block_budget)

    grid = (pl.cdiv(rows, TR), pl.cdiv(L, TL))               # (1, 1) for small inputs

    affine_spec = pl.BlockSpec((TR, 1), lambda r, l: (r, 0))
    data_spec = pl.BlockSpec((TR, TL), lambda r, l: (r, l))

    out2d = pl.pallas_call(
        _bn_inference_kernel,
        out_shape=jax.ShapeDtypeStruct((rows, L), x.dtype),
        grid=grid,
        in_specs=[affine_spec, affine_spec, data_spec],
        out_specs=data_spec,
        compiler_params=pltpu.CompilerParams(
            dimension_semantics=("parallel", "parallel"),
            vmem_limit_bytes=vmem_limit,
        ),
    )(scale_rows, shift_rows, x2d)

    return out2d.reshape(N, C, L)


def _reference(x, weight, bias, running_mean, running_var, eps=EPS):
    inv_std = 1.0 / jnp.sqrt(running_var + eps)
    scale = (weight * inv_std)[None, :, None]
    shift = (bias - running_mean * weight * inv_std)[None, :, None]
    return x * scale + shift


if __name__ == "__main__":
    key = jax.random.PRNGKey(0)
    kx, kw, kb, km, kv = jax.random.split(key, 5)

    N, C, L = 2, 4, 256
    x = jax.random.normal(kx, (N, C, L), dtype=jnp.float32)
    weight = jax.random.normal(kw, (C,), dtype=jnp.float32)
    bias = jax.random.normal(kb, (C,), dtype=jnp.float32)
    running_mean = jax.random.normal(km, (C,), dtype=jnp.float32)
    running_var = jax.random.uniform(
        kv, (C,), dtype=jnp.float32, minval=0.5, maxval=2.0
    )

    out = native_batch_norm_1d(x, weight, bias, running_mean, running_var)
    out = jax.block_until_ready(out)

    ref = _reference(x, weight, bias, running_mean, running_var)
    assert out.shape == (N, C, L)
    assert jnp.allclose(out, ref, atol=1e-5, rtol=1e-5), "mismatch vs reference"

    print("KERNEL_OK")
</pallas_src>

<mosaic_0001>
module attributes {stable_mosaic.version = 11 : i64} {
  func.func @_bn_inference_kernel(%arg0: i32, %arg1: i32, %arg2: memref<8x1xf32, #tpu.memory_space<vmem>>, %arg3: memref<8x1xf32, #tpu.memory_space<vmem>>, %arg4: memref<8x256xf32, #tpu.memory_space<vmem>>, %arg5: memref<8x256xf32, #tpu.memory_space<vmem>>) attributes {dimension_semantics = [#tpu.dimension_semantics<parallel>, #tpu.dimension_semantics<parallel>], iteration_bounds = array<i64: 1, 1>, scalar_prefetch = 0 : i64, scratch_operands = 0 : i64, tpu.core_type = #tpu.core_type<tc>, window_params = [{transform_indices = @transform_0, window_bounds = array<i64: 8, 1>}, {transform_indices = @transform_1, window_bounds = array<i64: 8, 1>}, {transform_indices = @transform_2, window_bounds = array<i64: 8, 256>}, {transform_indices = @transform_3, window_bounds = array<i64: 8, 256>}]} {
    %c0 = arith.constant 0 : index
    %c0_0 = arith.constant 0 : index
    %0 = vector.load %arg4[%c0, %c0_0] : memref<8x256xf32, #tpu.memory_space<vmem>>, vector<8x256xf32>
    %c0_1 = arith.constant 0 : index
    %c0_2 = arith.constant 0 : index
    %1 = vector.load %arg2[%c0_1, %c0_2] : memref<8x1xf32, #tpu.memory_space<vmem>>, vector<8x1xf32>
    %2 = vector.broadcast %1 : vector<8x1xf32> to vector<8x256xf32>
    %3 = arith.mulf %0, %2 : vector<8x256xf32>
    %c0_3 = arith.constant 0 : index
    %c0_4 = arith.constant 0 : index
    %4 = vector.load %arg3[%c0_3, %c0_4] : memref<8x1xf32, #tpu.memory_space<vmem>>, vector<8x1xf32>
    %5 = vector.broadcast %4 : vector<8x1xf32> to vector<8x256xf32>
    %6 = arith.addf %3, %5 : vector<8x256xf32>
    %c0_5 = arith.constant 0 : index
    %c0_6 = arith.constant 0 : index
    %7 = vector.load %arg5[%c0_5, %c0_6] : memref<8x256xf32, #tpu.memory_space<vmem>>, vector<8x256xf32>
    tpu.vector_store %arg5[%c0_5, %c0_6], %6 {strides = array<i32>} : memref<8x256xf32, #tpu.memory_space<vmem>>, vector<8x256xf32>,
    return
  }
  func.func @transform_0(%arg0: i32, %arg1: i32) -> (i32, i32) {
    %c0_i32 = arith.constant 0 : i32
    %c0_i32_0 = arith.constant 0 : i32
    return %arg0, %c0_i32 : i32, i32
  }
  func.func @transform_1(%arg0: i32, %arg1: i32) -> (i32, i32) {
    %c0_i32 = arith.constant 0 : i32
    %c0_i32_0 = arith.constant 0 : i32
    return %arg0, %c0_i32 : i32, i32
  }
  func.func @transform_2(%arg0: i32, %arg1: i32) -> (i32, i32) {
    %c0_i32 = arith.constant 0 : i32
    return %arg0, %arg1 : i32, i32
  }
  func.func @transform_3(%arg0: i32, %arg1: i32) -> (i32, i32) {
    %c0_i32 = arith.constant 0 : i32
    return %arg0, %arg1 : i32, i32
  }
}

</mosaic_0001>

<llo_original>
// kernel: tpu_custom_call.1
$region0: #{tpu_custom_call.1}
  #allocation0 [shape = 'u32[]', space=smem, size = 0x4, offset = 0x4, fixed_abs, tag = 'smem constant byte address 0x4 - core index']
  #allocation1 [shape = 'u32[144,128]{1,0:T(1,128)}', space=vmem, size = 0x12000, scoped, tag = 'internal scratch']
  %s0 = inlined_call_operand.vmem [shape: f32[8,1], index: 0, kind: input, shape index: {}]
  %s1 = inlined_call_operand.vmem [shape: f32[8,1], index: 1, kind: input, shape index: {}]
  %s2 = inlined_call_operand.vmem [shape: f32[8,256], index: 2, kind: input, shape index: {}]
  %s3 = inlined_call_operand.hbm [shape: f32[8,256], index: 3, kind: output, shape index: {}]
  %s4 = sld [smem:[#allocation0]]
  $region22: #{tpu_custom_call.1} parent=0
    _
  %s6 = ssub.s32 1, %s4
  %s7 = scalar_select 0, %s6, %s4
  $region1: #{tpu_custom_call.1} parent=0
    #allocation2 [shape = 'u8[8192]{0}', space=vmem, size = 0x2000, scoped, tag = 'output window, operand 0, single buffered']
    #allocation3 [shape = 's32[1]{0}', space=sflag, size = 0x4, scoped, tag = 'scoped memory for tpu_custom_call.1']
    %8 = vsyncpa [#allocation3], 0
    // Predicated region
    $region2: #{tpu_custom_call.1} parent=1 // pred_check
      _
    $region3: #{tpu_custom_call.1} parent=1 // pred_check_branch
      %10 = sbr.rel (0) target = $region5
    $region4: #{tpu_custom_call.1} parent=1 // pred_region
      _
    $region5: #{tpu_custom_call.1} parent=1 // pred_fallthru
      _
    // Predicated region
    $region6: #{tpu_custom_call.1} parent=1 // pred_check
      _
    $region7: #{tpu_custom_call.1} parent=1 // pred_check_branch
      %12 = sbr.rel (0) target = $region9
    $region8: #{tpu_custom_call.1} parent=1 // pred_region
      _
    $region9: #{tpu_custom_call.1} parent=1 // pred_fallthru
      _
    // Predicated region
    $region10: #{tpu_custom_call.1} parent=1 // pred_check
      _
    $region11: #{tpu_custom_call.1} parent=1 // pred_check_branch
      %14 = sbr.rel (0) target = $region13
    $region12: #{tpu_custom_call.1} parent=1 // pred_region
      _
    $region13: #{tpu_custom_call.1} parent=1 // pred_fallthru
      _
    %v15 = vld [vmem:[%s2] sm:$0xff]
    %v16 = vld [vmem:[%s2 + $0x8] sm:$0xff]
    %v17 = vld [vmem:[%s0] sm:$0xff]
    %19 = vset.pattern.permute.xlu0 0
    %20 = vperm.xlu0 %19, %v17
    %v21 = vpop.permute.xlu0 %20
    %v23 = vmul.f32 %v15, %v21
    %v24 = vmul.f32 %v16, %v21
    %v25 = vld [vmem:[%s1] sm:$0xff]
    %27 = vset.pattern.permute.xlu0 0
    %28 = vperm.xlu0 %27, %v25
    %v29 = vpop.permute.xlu0 %28
    %v31 = vadd.f32 %v23, %v29
    %v32 = vadd.f32 %v24, %v29
    %33 = vst [vmem:[#allocation2] sm:$0xff] %v31
    %34 = vst [vmem:[#allocation2 + $0x8] sm:$0xff] %v32
    // Predicated region
    $region14: #{tpu_custom_call.1} parent=1 // pred_check
      _
    $region15: #{tpu_custom_call.1} parent=1 // pred_check_branch
      %36 = sbr.rel (0) target = $region17
    $region16: #{tpu_custom_call.1} parent=1 // pred_region
      %s38 = ssub.s32 256, 256
      %39 = vsyncadd [#allocation3], %s38
      %s41 = sshll.u32 [#allocation2], 4
      %s42 = int_to_ptr.vmem [resolvable:$true] %s41
      %44 = dma.vmem_to_hbm [thread:$0]  %s42, 256, %s3, [#allocation3]
    $region17: #{tpu_custom_call.1} parent=1 // pred_fallthru
      _
    // Predicated region
    $region18: #{tpu_custom_call.1} parent=1 // pred_check
      _
    $region19: #{tpu_custom_call.1} parent=1 // pred_check_branch
      %46 = sbr.rel (0) target = $region21
    $region20: #{tpu_custom_call.1} parent=1 // pred_region
      %47 = dma.done [#allocation3], 256
    $region21: #{tpu_custom_call.1} parent=1 // pred_fallthru
      _
    %48 = vsyncpa [#allocation3], 1

</llo_original>
